<compile_context>
chip_gen: v7x
topology: tpu7x:2x2x1
jax: 0.10.0
libtpu: 0.0.40
codegen_flags: <defaults>
</compile_context>

<pallas_src>
import functools
import math

import jax
import jax.numpy as jnp
import numpy as np
from jax.experimental import pallas as pl
from jax.experimental.pallas import tpu as pltpu

_PERM_LANES = 128  # lane-dense padded width for the perm output


def _topk_pool_kernel(x_ref, w_ref, xtop_ref, perm_ref, *, ratio):
    Bb, M, C = x_ref.shape
    K = ratio

    x = x_ref[...]                                    # [Bb, M, C] f32
    w = w_ref[...]                                    # [1, C]     f32

    # score = tanh((x * w).sum(-1) / ||w||_2); rsqrt+mul -> EUP, no division.
    inv_norm = jax.lax.rsqrt(jnp.sum(w * w))
    dense = jnp.tanh(jnp.sum(x * w, axis=-1) * inv_norm)          # [Bb, M]

    # Hoisted iotas (JAX does not CSE broadcast_in_dim; build once, reuse K times).
    col_iota = jax.lax.broadcasted_iota(jnp.int32, (Bb, M), 1)    # [Bb, M]
    lane = jax.lax.broadcasted_iota(jnp.int32, (Bb, _PERM_LANES), 1)
    row_off = (pl.program_id(0) * Bb
               + jax.lax.broadcasted_iota(jnp.int32, (Bb, 1), 0)) * M   # [Bb, 1]
    neg = jnp.finfo(dense.dtype).min

    dense_cur = dense
    perm_out = jnp.zeros((Bb, _PERM_LANES), jnp.int32)
    sel_rows = []                                     # K x [Bb, C] scaled selected rows
    for k in range(K):                                # K small & static -> unrolled
        mx = jnp.max(dense_cur, axis=-1, keepdims=True)            # [Bb,1] == score[perm_k]
        idx = jnp.min(jnp.where(dense_cur == mx, col_iota, M),
                      axis=-1, keepdims=True)                      # [Bb,1] first argmax
        sel = col_iota == idx                                      # [Bb, M]
        # Fused gather + scaling: sum_m (score_k * 1[m == idx_k]) * x[:, m, :]
        coeff = jnp.where(sel, mx, 0.0)                            # [Bb, M]
        sel_rows.append(jnp.sum(coeff[:, :, None] * x, axis=1))    # [Bb, C] sublane reduce
        perm_out = jnp.where(lane == k, idx + row_off, perm_out)   # lane k <- global index
        dense_cur = jnp.where(sel, neg, dense_cur)                 # mask out selected node

    # k-major store: (K, Bb, C) keeps the store tile's sublane dim (Bb) full & 8-aligned.
    xtop_ref[...] = jnp.stack(sel_rows, axis=0).astype(xtop_ref.dtype)
    perm_ref[...] = perm_out


def _choose_block_batch(batch_size, nodes_per_graph, channels, itemsize,
                        vmem_budget_bytes=8 << 20):
    """Largest divisor of B with 8-aligned sublane blocks (Bb % 8 == 0) whose
    double-buffered x tile fits a conservative VMEM budget (safe on v7x's smaller
    VMEM as well as v5e/v6e scoped defaults)."""
    per_graph = nodes_per_graph * channels * itemsize
    for d in range(batch_size, 0, -1):
        if batch_size % d or d % 8:
            continue
        if 2 * d * per_graph <= vmem_budget_bytes:
            return d
    return batch_size   # full-array block is always a legal BlockSpec


def topk_pooling_forward(x, batch_size, ratio, weight, block_batch=None):
    """x: [N, C] node features, N = batch_size * nodes_per_graph (equal-sized graphs).

    Returns (x_top [B, ratio, C], perm [B*ratio]) matching the PyTorch forward.
    """
    N, C = x.shape
    assert N % batch_size == 0, "equal-sized graphs assumed"
    B = batch_size
    M = N // B
    K = ratio
    assert K <= M, "ratio must not exceed nodes per graph"
    # TODO(synk): variable-sized graphs (ragged `batch` vector + scatter_add
    # densification) are not expressible here; equal-sized graphs assumed, as the
    # module's x_top.view(bz, ratio, -1) already requires a constant k per graph.

    if block_batch is None:
        block_batch = _choose_block_batch(B, M, C, x.dtype.itemsize)
    Bb = block_batch
    assert B % Bb == 0, "block_batch must divide batch_size"
    assert Bb == B or Bb % 8 == 0, "block_batch must be 8-aligned or the full batch"

    x3 = x.reshape(B, M, C)
    grid = (B // Bb,)

    kernel = functools.partial(_topk_pool_kernel, ratio=K)
    x_top_kmaj, perm_pad = pl.pallas_call(
        kernel,
        grid=grid,
        in_specs=[
            pl.BlockSpec((Bb, M, C), lambda i: (i, 0, 0)),      # pipelined x tiles
            pl.BlockSpec((1, C), lambda i: (0, 0)),             # tiny weight vector
        ],
        out_specs=(
            pl.BlockSpec((K, Bb, C), lambda i: (0, i, 0)),          # k-major x_top
            pl.BlockSpec((Bb, _PERM_LANES), lambda i: (i, 0)),      # lane-padded perm
        ),
        out_shape=(
            jax.ShapeDtypeStruct((K, B, C), x.dtype),
            jax.ShapeDtypeStruct((B, _PERM_LANES), jnp.int32),
        ),
        compiler_params=pltpu.CompilerParams(
            dimension_semantics=("parallel",),   # megacore sharding on v7x; no-op on v5e/v6e
        ),
    )(x3, weight)

    # Layout plumbing outside the kernel: k-major -> (B, K, C); drop perm lane padding.
    x_top = jnp.transpose(x_top_kmaj, (1, 0, 2))
    perm = perm_pad[:, :K].reshape(-1)
    return x_top, perm


def _reference(x, batch_size, ratio, weight):
    """Pure-JAX reference mirroring the PyTorch forward."""
    N, C = x.shape
    M = N // batch_size
    score = jnp.tanh(jnp.sum(x * weight, axis=-1) / jnp.linalg.norm(weight))
    dense = score.reshape(batch_size, M)
    order = jnp.argsort(-dense, axis=-1)[:, :ratio]                 # descending, stable
    perm = (order + jnp.arange(batch_size)[:, None] * M).reshape(-1)
    x_top = x[perm] * score[perm][:, None]
    return x_top.reshape(batch_size, ratio, C), perm


if __name__ == "__main__":
    B = 32     # graphs in the batch
    M = 8      # nodes per graph (equal-sized graphs)
    C = 32     # in_channels
    RATIO = 3  # nodes kept per graph
    N = B * M

    key = jax.random.PRNGKey(0)
    kx, kw = jax.random.split(key)
    x = jax.random.normal(kx, (N, C), dtype=jnp.float32)

    # glorot-uniform init for weight of shape (1, in_channels)
    bound = math.sqrt(6.0 / (1 + C))
    weight = jax.random.uniform(kw, (1, C), dtype=jnp.float32,
                                minval=-bound, maxval=bound)

    # block_batch=8 -> grid of 4 pipelined, megacore-shardable steps.
    x_top, perm = topk_pooling_forward(x, B, RATIO, weight, block_batch=8)
    x_top = jax.block_until_ready(x_top)
    perm = jax.block_until_ready(perm)

    x_top_ref, perm_ref = _reference(x, B, RATIO, weight)
    np.testing.assert_array_equal(np.asarray(perm), np.asarray(perm_ref))
    np.testing.assert_allclose(np.asarray(x_top), np.asarray(x_top_ref),
                               rtol=1e-5, atol=1e-5)

    print("KERNEL_OK")
</pallas_src>

<mosaic_0001>
module attributes {stable_mosaic.version = 11 : i64} {
  func.func @_topk_pool_kernel(%arg0: i32, %arg1: memref<8x8x32xf32, #tpu.memory_space<vmem>>, %arg2: memref<1x32xf32, #tpu.memory_space<vmem>>, %arg3: memref<3x8x32xf32, #tpu.memory_space<vmem>>, %arg4: memref<8x128xi32, #tpu.memory_space<vmem>>) attributes {dimension_semantics = [#tpu.dimension_semantics<parallel>], iteration_bounds = array<i64: 4>, scalar_prefetch = 0 : i64, scratch_operands = 0 : i64, tpu.core_type = #tpu.core_type<tc>, window_params = [{transform_indices = @transform_0, window_bounds = array<i64: 8, 8, 32>}, {pipeline_mode = #tpu.pipeline_mode<synchronous>, transform_indices = @transform_1, window_bounds = array<i64: 1, 32>}, {transform_indices = @transform_2, window_bounds = array<i64: 3, 8, 32>}, {transform_indices = @transform_3, window_bounds = array<i64: 8, 128>}]} {
    %c0 = arith.constant 0 : index
    %c0_0 = arith.constant 0 : index
    %c0_1 = arith.constant 0 : index
    %0 = vector.load %arg1[%c0, %c0_0, %c0_1] : memref<8x8x32xf32, #tpu.memory_space<vmem>>, vector<8x8x32xf32>
    %c0_2 = arith.constant 0 : index
    %c0_3 = arith.constant 0 : index
    %1 = vector.load %arg2[%c0_2, %c0_3] : memref<1x32xf32, #tpu.memory_space<vmem>>, vector<1x32xf32>
    %2 = arith.mulf %1, %1 : vector<1x32xf32>
    %3 = vector.shape_cast %2 : vector<1x32xf32> to vector<1x1x32xf32>
    %cst = arith.constant dense<0.000000e+00> : vector<1xf32>
    %4 = vector.multi_reduction <add>, %3, %cst [1, 2] : vector<1x1x32xf32> to vector<1xf32>
    %5 = vector.shape_cast %4 : vector<1xf32> to vector<1x1x1xf32>
    %6 = vector.extract %5[0, 0, 0] : f32 from vector<1x1x1xf32>
    %7 = math.rsqrt %6 : f32
    %8 = vector.shape_cast %1 : vector<1x32xf32> to vector<1x1x32xf32>
    %9 = vector.broadcast %8 : vector<1x1x32xf32> to vector<8x8x32xf32>
    %10 = arith.mulf %0, %9 : vector<8x8x32xf32>
    %cst_4 = arith.constant dense<0.000000e+00> : vector<8x8xf32>
    %11 = vector.multi_reduction <add>, %10, %cst_4 [2] : vector<8x8x32xf32> to vector<8x8xf32>
    %12 = vector.broadcast %7 : f32 to vector<8x8xf32>
    %13 = arith.mulf %11, %12 : vector<8x8xf32>
    %14 = math.tanh %13 : vector<8x8xf32>
    %15 = tpu.iota {dimensions = array<i32: 1>} : vector<8x8xi32>
    %16 = tpu.iota {dimensions = array<i32: 1>} : vector<8x128xi32>
    %c8_i32 = arith.constant 8 : i32
    %17 = arith.muli %arg0, %c8_i32 : i32
    %18 = tpu.iota {dimensions = array<i32: 0>} : vector<8x1xi32>
    %19 = vector.broadcast %17 : i32 to vector<8x1xi32>
    %20 = arith.addi %19, %18 : vector<8x1xi32>
    %c8_i32_5 = arith.constant 8 : i32
    %21 = vector.broadcast %c8_i32_5 : i32 to vector<8x1xi32>
    %22 = arith.muli %20, %21 : vector<8x1xi32>
    %c0_i32 = arith.constant 0 : i32
    %23 = vector.broadcast %c0_i32 : i32 to vector<8x128xi32>
    %cst_6 = arith.constant dense<0xFF800000> : vector<8xf32>
    %24 = vector.multi_reduction <maximumf>, %14, %cst_6 [1] : vector<8x8xf32> to vector<8xf32>
    %25 = vector.shape_cast %24 : vector<8xf32> to vector<8x1xf32>
    %26 = vector.broadcast %25 : vector<8x1xf32> to vector<8x8xf32>
    %27 = arith.cmpf oeq, %14, %26 : vector<8x8xf32>
    %c8_i32_7 = arith.constant 8 : i32
    %28 = vector.broadcast %c8_i32_7 : i32 to vector<8x8xi32>
    %29 = arith.select %27, %15, %28 : vector<8x8xi1>, vector<8x8xi32>
    %cst_8 = arith.constant dense<2147483647> : vector<8xi32>
    %30 = vector.multi_reduction <minsi>, %29, %cst_8 [1] : vector<8x8xi32> to vector<8xi32>
    %31 = vector.shape_cast %30 : vector<8xi32> to vector<8x1xi32>
    %32 = vector.broadcast %31 : vector<8x1xi32> to vector<8x8xi32>
    %33 = arith.cmpi eq, %15, %32 : vector<8x8xi32>
    %cst_9 = arith.constant 0.000000e+00 : f32
    %34 = vector.shape_cast %25 : vector<8x1xf32> to vector<8x1xf32>
    %35 = vector.broadcast %34 : vector<8x1xf32> to vector<8x8xf32>
    %36 = vector.broadcast %cst_9 : f32 to vector<8x8xf32>
    %37 = arith.select %33, %35, %36 : vector<8x8xi1>, vector<8x8xf32>
    %38 = vector.shape_cast %37 : vector<8x8xf32> to vector<8x8x1xf32>
    %39 = vector.broadcast %38 : vector<8x8x1xf32> to vector<8x8x32xf32>
    %40 = arith.mulf %39, %0 : vector<8x8x32xf32>
    %cst_10 = arith.constant dense<0.000000e+00> : vector<8x32xf32>
    %41 = vector.multi_reduction <add>, %40, %cst_10 [1] : vector<8x8x32xf32> to vector<8x32xf32>
    %c0_i32_11 = arith.constant 0 : i32
    %42 = vector.broadcast %c0_i32_11 : i32 to vector<8x128xi32>
    %43 = arith.cmpi eq, %16, %42 : vector<8x128xi32>
    %44 = arith.addi %31, %22 : vector<8x1xi32>
    %45 = vector.shape_cast %44 : vector<8x1xi32> to vector<8x1xi32>
    %46 = vector.broadcast %45 : vector<8x1xi32> to vector<8x128xi32>
    %47 = arith.select %43, %46, %23 : vector<8x128xi1>, vector<8x128xi32>
    %cst_12 = arith.constant -3.40282347E+38 : f32
    %48 = vector.broadcast %cst_12 : f32 to vector<8x8xf32>
    %49 = arith.select %33, %48, %14 : vector<8x8xi1>, vector<8x8xf32>
    %cst_13 = arith.constant dense<0xFF800000> : vector<8xf32>
    %50 = vector.multi_reduction <maximumf>, %49, %cst_13 [1] : vector<8x8xf32> to vector<8xf32>
    %51 = vector.shape_cast %50 : vector<8xf32> to vector<8x1xf32>
    %52 = vector.broadcast %51 : vector<8x1xf32> to vector<8x8xf32>
    %53 = arith.cmpf oeq, %49, %52 : vector<8x8xf32>
    %c8_i32_14 = arith.constant 8 : i32
    %54 = vector.broadcast %c8_i32_14 : i32 to vector<8x8xi32>
    %55 = arith.select %53, %15, %54 : vector<8x8xi1>, vector<8x8xi32>
    %cst_15 = arith.constant dense<2147483647> : vector<8xi32>
    %56 = vector.multi_reduction <minsi>, %55, %cst_15 [1] : vector<8x8xi32> to vector<8xi32>
    %57 = vector.shape_cast %56 : vector<8xi32> to vector<8x1xi32>
    %58 = vector.broadcast %57 : vector<8x1xi32> to vector<8x8xi32>
    %59 = arith.cmpi eq, %15, %58 : vector<8x8xi32>
    %cst_16 = arith.constant 0.000000e+00 : f32
    %60 = vector.shape_cast %51 : vector<8x1xf32> to vector<8x1xf32>
    %61 = vector.broadcast %60 : vector<8x1xf32> to vector<8x8xf32>
    %62 = vector.broadcast %cst_16 : f32 to vector<8x8xf32>
    %63 = arith.select %59, %61, %62 : vector<8x8xi1>, vector<8x8xf32>
    %64 = vector.shape_cast %63 : vector<8x8xf32> to vector<8x8x1xf32>
    %65 = vector.broadcast %64 : vector<8x8x1xf32> to vector<8x8x32xf32>
    %66 = arith.mulf %65, %0 : vector<8x8x32xf32>
    %cst_17 = arith.constant dense<0.000000e+00> : vector<8x32xf32>
    %67 = vector.multi_reduction <add>, %66, %cst_17 [1] : vector<8x8x32xf32> to vector<8x32xf32>
    %c1_i32 = arith.constant 1 : i32
    %68 = vector.broadcast %c1_i32 : i32 to vector<8x128xi32>
    %69 = arith.cmpi eq, %16, %68 : vector<8x128xi32>
    %70 = arith.addi %57, %22 : vector<8x1xi32>
    %71 = vector.shape_cast %70 : vector<8x1xi32> to vector<8x1xi32>
    %72 = vector.broadcast %71 : vector<8x1xi32> to vector<8x128xi32>
    %73 = arith.select %69, %72, %47 : vector<8x128xi1>, vector<8x128xi32>
    %cst_18 = arith.constant -3.40282347E+38 : f32
    %74 = vector.broadcast %cst_18 : f32 to vector<8x8xf32>
    %75 = arith.select %59, %74, %49 : vector<8x8xi1>, vector<8x8xf32>
    %cst_19 = arith.constant dense<0xFF800000> : vector<8xf32>
    %76 = vector.multi_reduction <maximumf>, %75, %cst_19 [1] : vector<8x8xf32> to vector<8xf32>
    %77 = vector.shape_cast %76 : vector<8xf32> to vector<8x1xf32>
    %78 = vector.broadcast %77 : vector<8x1xf32> to vector<8x8xf32>
    %79 = arith.cmpf oeq, %75, %78 : vector<8x8xf32>
    %c8_i32_20 = arith.constant 8 : i32
    %80 = vector.broadcast %c8_i32_20 : i32 to vector<8x8xi32>
    %81 = arith.select %79, %15, %80 : vector<8x8xi1>, vector<8x8xi32>
    %cst_21 = arith.constant dense<2147483647> : vector<8xi32>
    %82 = vector.multi_reduction <minsi>, %81, %cst_21 [1] : vector<8x8xi32> to vector<8xi32>
    %83 = vector.shape_cast %82 : vector<8xi32> to vector<8x1xi32>
    %84 = vector.broadcast %83 : vector<8x1xi32> to vector<8x8xi32>
    %85 = arith.cmpi eq, %15, %84 : vector<8x8xi32>
    %cst_22 = arith.constant 0.000000e+00 : f32
    %86 = vector.shape_cast %77 : vector<8x1xf32> to vector<8x1xf32>
    %87 = vector.broadcast %86 : vector<8x1xf32> to vector<8x8xf32>
    %88 = vector.broadcast %cst_22 : f32 to vector<8x8xf32>
    %89 = arith.select %85, %87, %88 : vector<8x8xi1>, vector<8x8xf32>
    %90 = vector.shape_cast %89 : vector<8x8xf32> to vector<8x8x1xf32>
    %91 = vector.broadcast %90 : vector<8x8x1xf32> to vector<8x8x32xf32>
    %92 = arith.mulf %91, %0 : vector<8x8x32xf32>
    %cst_23 = arith.constant dense<0.000000e+00> : vector<8x32xf32>
    %93 = vector.multi_reduction <add>, %92, %cst_23 [1] : vector<8x8x32xf32> to vector<8x32xf32>
    %c2_i32 = arith.constant 2 : i32
    %94 = vector.broadcast %c2_i32 : i32 to vector<8x128xi32>
    %95 = arith.cmpi eq, %16, %94 : vector<8x128xi32>
    %96 = arith.addi %83, %22 : vector<8x1xi32>
    %97 = vector.shape_cast %96 : vector<8x1xi32> to vector<8x1xi32>
    %98 = vector.broadcast %97 : vector<8x1xi32> to vector<8x128xi32>
    %99 = arith.select %95, %98, %73 : vector<8x128xi1>, vector<8x128xi32>
    %100 = vector.shape_cast %41 : vector<8x32xf32> to vector<1x8x32xf32>
    %101 = vector.shape_cast %67 : vector<8x32xf32> to vector<1x8x32xf32>
    %102 = vector.shape_cast %93 : vector<8x32xf32> to vector<1x8x32xf32>
    %103 = tpu.concatenate %100, %101, %102 in 0 : vector<1x8x32xf32>, vector<1x8x32xf32>, vector<1x8x32xf32> -> vector<3x8x32xf32>
    %c0_24 = arith.constant 0 : index
    %c0_25 = arith.constant 0 : index
    %c0_26 = arith.constant 0 : index
    %104 = vector.load %arg3[%c0_24, %c0_25, %c0_26] : memref<3x8x32xf32, #tpu.memory_space<vmem>>, vector<3x8x32xf32>
    tpu.vector_store %arg3[%c0_24, %c0_25, %c0_26], %103 {strides = array<i32>} : memref<3x8x32xf32, #tpu.memory_space<vmem>>, vector<3x8x32xf32>,
    %c0_27 = arith.constant 0 : index
    %c0_28 = arith.constant 0 : index
    %105 = vector.load %arg4[%c0_27, %c0_28] : memref<8x128xi32, #tpu.memory_space<vmem>>, vector<8x128xi32>
    tpu.vector_store %arg4[%c0_27, %c0_28], %99 {strides = array<i32>} : memref<8x128xi32, #tpu.memory_space<vmem>>, vector<8x128xi32>,
    return
  }
  func.func @transform_0(%arg0: i32) -> (i32, i32, i32) {
    %c0_i32 = arith.constant 0 : i32
    %c0_i32_0 = arith.constant 0 : i32
    %c0_i32_1 = arith.constant 0 : i32
    return %arg0, %c0_i32, %c0_i32_0 : i32, i32, i32
  }
  func.func @transform_1(%arg0: i32) -> (i32, i32) {
    %c0_i32 = arith.constant 0 : i32
    %c0_i32_0 = arith.constant 0 : i32
    %c0_i32_1 = arith.constant 0 : i32
    return %c0_i32, %c0_i32_0 : i32, i32
  }
  func.func @transform_2(%arg0: i32) -> (i32, i32, i32) {
    %c0_i32 = arith.constant 0 : i32
    %c0_i32_0 = arith.constant 0 : i32
    %c0_i32_1 = arith.constant 0 : i32
    return %c0_i32, %arg0, %c0_i32_0 : i32, i32, i32
  }
  func.func @transform_3(%arg0: i32) -> (i32, i32) {
    %c0_i32 = arith.constant 0 : i32
    %c0_i32_0 = arith.constant 0 : i32
    return %arg0, %c0_i32 : i32, i32
  }
}

</mosaic_0001>

<llo_original>
// kernel: tpu_custom_call.1
$region0: #{tpu_custom_call.1}
  #allocation0 [shape = 'u32[]', space=smem, size = 0x4, offset = 0x4, fixed_abs, tag = 'smem constant byte address 0x4 - core index']
  #allocation1 [shape = 'u32[144,128]{1,0:T(1,128)}', space=vmem, size = 0x12000, scoped, tag = 'internal scratch']
  %s0 = inlined_call_operand.hbm [shape: f32[32,8,32], index: 0, kind: input, shape index: {}]
  %s1 = inlined_call_operand.vmem [shape: f32[1,32], index: 1, kind: input, shape index: {}]
  %s2 = inlined_call_operand.hbm [shape: f32[3,32,32], index: 2, kind: output, shape index: {0}]
  %s3 = inlined_call_operand.hbm [shape: s32[32,128], index: 3, kind: output, shape index: {1}]
  %4 = xla_tuple %s2, %s3
  %s5 = sld [smem:[#allocation0]]
  $region53: #{tpu_custom_call.1} parent=0
    _
  %s7 = ssub.s32 1, %s5
  %s8 = scalar_select 0, %s7, %s5
  $region1: #{tpu_custom_call.1} parent=0
    #allocation2 [shape = 'u8[65536]{0}', space=vmem, size = 0x10000, scoped, tag = 'input window, operand 0']
    #allocation3 [shape = 's32[2]{0}', space=sflag, size = 0x8, scoped, tag = 'scoped memory for tpu_custom_call.1']
    #allocation4 [shape = 's32[2]{0}', space=sflag, size = 0x8, scoped, tag = 'scoped memory for tpu_custom_call.1']
    #allocation5 [shape = 'u8[24576]{0}', space=vmem, size = 0x6000, scoped, tag = 'output window, operand 0']
    #allocation6 [shape = 'u8[8192]{0}', space=vmem, size = 0x2000, scoped, tag = 'output window, operand 1']
    #allocation7 [shape = 's32[2]{0}', space=sflag, size = 0x8, scoped, tag = 'scoped memory for tpu_custom_call.1']
    %9 = vsyncpa [#allocation3], 0
    %s10 = scalar_lea.sflag [#allocation3], 1
    %11 = vsyncpa %s10, 0
    %12 = vsyncpa [#allocation4], 0
    %s13 = scalar_lea.sflag [#allocation4], 1
    %14 = vsyncpa %s13, 0
    %15 = vsyncpa [#allocation7], 0
    %s16 = scalar_lea.sflag [#allocation7], 1
    %17 = vsyncpa %s16, 0
    loop: start=0, step=1, limit=6
    $region2: #{tpu_custom_call.1} parent=1 // loop_pre_header
      _
    $region3: #{tpu_custom_call.1} parent=1 // loop_header
      %s19 = sphi 0, %s23
      %p20 = scmp.ge.s32.totalorder %s19, 6
      %s29 = sphi 0, %s31
      %s32 = sphi 0, %s29
      %s33 = sphi 0, %s32
      %s49 = sphi 0, %s33
      %s53 = sphi 0, %s53
      %s55 = sphi 0, %s53
      %s56 = sphi 0, %s55
      %s70 = sphi 0, %s56
      %s76 = sphi 0, %s78
      %s79 = sphi 0, %s76
      %s80 = sphi 0, %s79
      %s96 = sphi 0, %s80
      %s102 = sphi 0, %s104
      %s105 = sphi 0, %s102
      %s106 = sphi 0, %s105
      %s122 = sphi 0, %s106
    $region4: #{tpu_custom_call.1} parent=1 // loop_header_branch
      %22 = sbr.rel (%p20) target = $region8
    $region5: #{tpu_custom_call.1} parent=1 // loop_body
      %s24 = ssub.s32 %s19, 1
      %s25 = ssub.s32 %s19, 2
      %s26 = sadd.s32 %s19, 1
      %s27 = ssub.s32 %s19, %s26
      %p28 = scmp.eq.s32.totalorder %s27, 0
      %s30 = sadd.s32 %s29, 1
      %s31 = scalar_select %p28, %s29, %s30
      %p34 = pneg %p28
      %p35 = scmp.eq.s32.totalorder %s19, 3
      %p36 = por %p34, %p35
      %p37 = scmp.ne.s32.totalorder %s29, %s32
      %p38 = scmp.eq.s32.totalorder %s19, 0
      %p39 = por %p37, %p38
      %p40 = scmp.ne.s32.totalorder %s29, %s32
      %p41 = scmp.eq.s32.totalorder %s24, 3
      %p42 = por %p40, %p41
      %p43 = scmp.ne.s32.totalorder %s32, %s33
      %p44 = scmp.eq.s32.totalorder %s24, 0
      %p45 = por %p43, %p44
      %p46 = scmp.ne.s32.totalorder %s32, %s33
      %p47 = scmp.eq.s32.totalorder %s25, 3
      %p48 = por %p46, %p47
      %p50 = scmp.ne.s32.totalorder %s33, %s49
      %p51 = scmp.eq.s32.totalorder %s25, 0
      %p52 = por %p50, %p51
      %s54 = sadd.s32 %s53, 1
      %p57 = scmp.eq.s32.totalorder %s19, 3
      %p58 = scmp.ne.s32.totalorder %s53, %s55
      %p59 = scmp.eq.s32.totalorder %s19, 0
      %p60 = por %p58, %p59
      %p61 = scmp.ne.s32.totalorder %s53, %s55
      %p62 = scmp.eq.s32.totalorder %s24, 3
      %p63 = por %p61, %p62
      %p64 = scmp.ne.s32.totalorder %s55, %s56
      %p65 = scmp.eq.s32.totalorder %s24, 0
      %p66 = por %p64, %p65
      %p67 = scmp.ne.s32.totalorder %s55, %s56
      %p68 = scmp.eq.s32.totalorder %s25, 3
      %p69 = por %p67, %p68
      %p71 = scmp.ne.s32.totalorder %s56, %s70
      %p72 = scmp.eq.s32.totalorder %s25, 0
      %p73 = por %p71, %p72
      %s74 = ssub.s32 %s19, %s26
      %p75 = scmp.eq.s32.totalorder %s74, 0
      %s77 = sadd.s32 %s76, 1
      %s78 = scalar_select %p75, %s76, %s77
      %p81 = pneg %p75
      %p82 = scmp.eq.s32.totalorder %s19, 3
      %p83 = por %p81, %p82
      %p84 = scmp.ne.s32.totalorder %s76, %s79
      %p85 = scmp.eq.s32.totalorder %s19, 0
      %p86 = por %p84, %p85
      %p87 = scmp.ne.s32.totalorder %s76, %s79
      %p88 = scmp.eq.s32.totalorder %s24, 3
      %p89 = por %p87, %p88
      %p90 = scmp.ne.s32.totalorder %s79, %s80
      %p91 = scmp.eq.s32.totalorder %s24, 0
      %p92 = por %p90, %p91
      %p93 = scmp.ne.s32.totalorder %s79, %s80
      %p94 = scmp.eq.s32.totalorder %s25, 3
      %p95 = por %p93, %p94
      %p97 = scmp.ne.s32.totalorder %s80, %s96
      %p98 = scmp.eq.s32.totalorder %s25, 0
      %p99 = por %p97, %p98
      %s100 = ssub.s32 %s19, %s26
      %p101 = scmp.eq.s32.totalorder %s100, 0
      %s103 = sadd.s32 %s102, 1
      %s104 = scalar_select %p101, %s102, %s103
      %p107 = pneg %p101
      %p108 = scmp.eq.s32.totalorder %s19, 3
      %p109 = por %p107, %p108
      %p110 = scmp.ne.s32.totalorder %s102, %s105
      %p111 = scmp.eq.s32.totalorder %s19, 0
      %p112 = por %p110, %p111
      %p113 = scmp.ne.s32.totalorder %s102, %s105
      %p114 = scmp.eq.s32.totalorder %s24, 3
      %p115 = por %p113, %p114
      %p116 = scmp.ne.s32.totalorder %s105, %s106
      %p117 = scmp.eq.s32.totalorder %s24, 0
      %p118 = por %p116, %p117
      %p119 = scmp.ne.s32.totalorder %s105, %s106
      %p120 = scmp.eq.s32.totalorder %s25, 3
      %p121 = por %p119, %p120
      %p123 = scmp.ne.s32.totalorder %s106, %s122
      %p124 = scmp.eq.s32.totalorder %s25, 0
      %p125 = por %p123, %p124
      %p126 = scmp.le.s32.totalorder 1, %s19
      %p127 = scmp.lt.s32.totalorder %s19, 5
      %p128 = pnand %p126, %p127
      %p129 = pneg %p128
      // Predicated region
      $region9: #{tpu_custom_call.1} parent=5 // pred_check
        _
      $region10: #{tpu_custom_call.1} parent=5 // pred_check_branch
        %131 = sbr.rel (%p128) target = $region12
      $region11: #{tpu_custom_call.1} parent=5 // pred_region
        %s132 = ssub.s32 %s19, 1
        // Predicated region
        $region13: #{tpu_custom_call.1} parent=11 // pred_check
          %p133 = pneg %p66
        $region14: #{tpu_custom_call.1} parent=11 // pred_check_branch
          %135 = sbr.rel (%p133) target = $region16
        $region15: #{tpu_custom_call.1} parent=11 // pred_region
          _
        $region16: #{tpu_custom_call.1} parent=11 // pred_fallthru
          _
      $region12: #{tpu_custom_call.1} parent=5 // pred_fallthru
        _
      %p136 = scmp.lt.s32.totalorder %s19, 4
      // Predicated region
      $region17: #{tpu_custom_call.1} parent=5 // pred_check
        %p137 = pneg %p136
      $region18: #{tpu_custom_call.1} parent=5 // pred_check_branch
        %139 = sbr.rel (%p137) target = $region20
      $region19: #{tpu_custom_call.1} parent=5 // pred_region
        // Predicated region
        $region21: #{tpu_custom_call.1} parent=19 // pred_check
          %p140 = pneg %p39
        $region22: #{tpu_custom_call.1} parent=19 // pred_check_branch
          %142 = sbr.rel (%p140) target = $region24
        $region23: #{tpu_custom_call.1} parent=19 // pred_region
          %s143 = sand.u32 %s29, 1
          %s144 = scalar_lea.sflag [#allocation3], %s143
          %s145 = sand.u32 %s29, 1
          %s146 = smul.addr %s145, 64
          %s147 = scalar_lea.vmem [#allocation2], %s146
          %s148 = smul.u32 8, %s19
          %s150 = ssub.s32 1024, 1024
          %151 = vsyncadd %s144, %s150
          %s152 = smul.addr %s148, 128
          %s153 = scalar_lea.hbm %s0, %s152
          %s154 = sshll.u32 %s147, 4
          %s155 = int_to_ptr.vmem [resolvable:$true] %s154
          %160 = dma.hbm_to_vmem [thread:$0]  %s153, 1024, %s155, %s144, 128, 128, 8
        $region24: #{tpu_custom_call.1} parent=19 // pred_fallthru
          _
      $region20: #{tpu_custom_call.1} parent=5 // pred_fallthru
        _
      %p161 = scmp.le.s32.totalorder 1, %s19
      %p162 = scmp.lt.s32.totalorder %s19, 5
      %p163 = pnand %p161, %p162
      %p164 = pneg %p163
      // Predicated region
      $region25: #{tpu_custom_call.1} parent=5 // pred_check
        _
      $region26: #{tpu_custom_call.1} parent=5 // pred_check_branch
        %166 = sbr.rel (%p163) target = $region28
      $region27: #{tpu_custom_call.1} parent=5 // pred_region
        %s167 = ssub.s32 %s19, 1
        %s168 = sand.u32 %s32, 1
        %s169 = scalar_lea.sflag [#allocation3], %s168
        %s170 = sand.u32 %s32, 1
        %s171 = smul.addr %s170, 64
        %s172 = scalar_lea.vmem [#allocation2], %s171
        // Predicated region
        $region29: #{tpu_custom_call.1} parent=27 // pred_check
          %p173 = pneg %p45
        $region30: #{tpu_custom_call.1} parent=27 // pred_check_branch
          %175 = sbr.rel (%p173) target = $region32
        $region31: #{tpu_custom_call.1} parent=27 // pred_region
          %176 = dma.done %s169, 1024
        $region32: #{tpu_custom_call.1} parent=27 // pred_fallthru
          _
        %s177 = sand.u32 %s32, 1
        %s178 = scalar_lea.sflag [#allocation3], %s177
        %s179 = sand.u32 %s32, 1
        %s180 = smul.addr %s179, 64
        %s181 = scalar_lea.vmem [#allocation2], %s180
        %p182 = pneg %p45
        %p183 = pneg %p42
        %p184 = pneg %p66
        %p185 = pneg %p63
        %p186 = pneg %p92
        %p187 = pneg %p89
        %s188 = sand.u32 %s79, 1
        %s189 = scalar_lea.sflag [#allocation4], %s188
        %s190 = sand.u32 %s79, 1
        %s191 = smul.addr %s190, 24
        %s192 = scalar_lea.vmem [#allocation5], %s191
        %p193 = pneg %p118
        %p194 = pneg %p115
        %s195 = sand.u32 %s105, 1
        %s196 = scalar_lea.sflag [#allocation7], %s195
        %s197 = sand.u32 %s105, 1
        %s198 = smul.addr %s197, 8
        %s199 = scalar_lea.vmem [#allocation6], %s198
        %s200 = smul.u32 8, %s24
        %v201 = vld [vmem:[%s172] sm:$0xff]
        %v202 = vld [vmem:[%s172 + $0x8] sm:$0xff]
        %v203 = vld [vmem:[%s172 + $0x10] sm:$0xff]
        %v204 = vld [vmem:[%s172 + $0x18] sm:$0xff]
        %v205 = vld [vmem:[%s172 + $0x20] sm:$0xff]
        %v206 = vld [vmem:[%s172 + $0x28] sm:$0xff]
        %v207 = vld [vmem:[%s172 + $0x30] sm:$0xff]
        %v208 = vld [vmem:[%s172 + $0x38] sm:$0xff]
        %v209 = vld [vmem:[%s1] sm:$0x1]
        %v210 = vmul.f32 %v209, %v209
        %vm211 = vcmask 253952
        %v212 = vsel %vm211, %v210, 0.0
        %213 = vadd.xlane.f32.xlu0 %v212
        %v214 = vpop.xlane.xlu0 %213
        %v215 = vrot.slane %v214, 4
        %v216 = vadd.f32 %v214, %v215
        %v217 = vrot.slane %v216, 2
        %v218 = vadd.f32 %v216, %v217
        %v219 = vrot.slane %v218, 1
        %v220 = vadd.f32 %v218, %v219
        %s221 = vtos %v220
        %v222 = vstv %s221
        %v223 = vrsqrt.pop %v222
        %s224 = vtos %v223
        %v226 = vlaneseq
        %v227 = vshrl.u32 %v226, 7
        %v228 = vsub.s32 0, %v227
        %v229 = vrot.slane %v209, %v228
        %v231 = vmul.f32 %v201, %v229
        %v232 = vmul.f32 %v202, %v229
        %v233 = vmul.f32 %v203, %v229
        %v234 = vmul.f32 %v204, %v229
        %v235 = vmul.f32 %v205, %v229
        %v236 = vmul.f32 %v206, %v229
        %v237 = vmul.f32 %v207, %v229
        %v238 = vmul.f32 %v208, %v229
        %vm239 = vcmask 261120
        %v240 = vsel %vm239, %v231, 0.0
        %241 = vadd.xlane.f32.xlu0 %v240
        %v242 = vpop.xlane.xlu0 %241
        %v243 = vsel %vm239, %v232, 0.0
        %244 = vadd.xlane.f32.xlu0 %v243
        %v245 = vpop.xlane.xlu0 %244
        %v246 = vsel %vm239, %v233, 0.0
        %247 = vadd.xlane.f32.xlu0 %v246
        %v248 = vpop.xlane.xlu0 %247
        %v249 = vsel %vm239, %v234, 0.0
        %250 = vadd.xlane.f32.xlu0 %v249
        %v251 = vpop.xlane.xlu0 %250
        %v252 = vsel %vm239, %v235, 0.0
        %253 = vadd.xlane.f32.xlu0 %v252
        %v254 = vpop.xlane.xlu0 %253
        %v255 = vsel %vm239, %v236, 0.0
        %256 = vadd.xlane.f32.xlu0 %v255
        %v257 = vpop.xlane.xlu0 %256
        %v258 = vsel %vm239, %v237, 0.0
        %259 = vadd.xlane.f32.xlu0 %v258
        %v260 = vpop.xlane.xlu0 %259
        %v261 = vsel %vm239, %v238, 0.0
        %262 = vadd.xlane.f32.xlu0 %v261
        %v263 = vpop.xlane.xlu0 %262
        %v264 = vstv %s224
        %v265 = vmul.f32 %v242, %v264
        %v266 = vmul.f32 %v245, %v264
        %v267 = vmul.f32 %v248, %v264
        %v268 = vmul.f32 %v251, %v264
        %v269 = vmul.f32 %v254, %v264
        %v270 = vmul.f32 %v257, %v264
        %v271 = vmul.f32 %v260, %v264
        %v272 = vmul.f32 %v263, %v264
        %v273 = vtanh.pop %v265
        %v274 = vtanh.pop %v266
        %v275 = vtanh.pop %v267
        %v276 = vtanh.pop %v268
        %v277 = vtanh.pop %v269
        %v278 = vtanh.pop %v270
        %v279 = vtanh.pop %v271
        %v280 = vtanh.pop %v272
        %v281 = vlaneseq
        %v282 = vand.u32 %v281, 127
        %s283 = smul.u32 %s24, 8
        %v284 = vlaneseq
        %v285 = vshrl.u32 %v284, 7
        %v286 = vstv %s283
        %v287 = vadd.s32 %v286, %v285
        %v288 = vmul.u32 %v287, 8
        %v297 = vlaneseq
        %v298 = vshrl.u32 %v297, 7
        %v299 = vsub.s32 %v282, %v298
        %v300 = vrot.slane %v273, %v299
        %v301 = vlaneseq
        %v302 = vshrl.u32 %v301, 7
        %v303 = vsub.s32 %v282, %v302
        %v304 = vrot.slane %v274, %v303
        %v305 = vlaneseq
        %v306 = vshrl.u32 %v305, 7
        %v307 = vsub.s32 %v282, %v306
        %v308 = vrot.slane %v275, %v307
        %v309 = vlaneseq
        %v310 = vshrl.u32 %v309, 7
        %v311 = vsub.s32 %v282, %v310
        %v312 = vrot.slane %v276, %v311
        %v313 = vlaneseq
        %v314 = vshrl.u32 %v313, 7
        %v315 = vsub.s32 %v282, %v314
        %v316 = vrot.slane %v277, %v315
        %v317 = vlaneseq
        %v318 = vshrl.u32 %v317, 7
        %v319 = vsub.s32 %v282, %v318
        %v320 = vrot.slane %v278, %v319
        %v321 = vlaneseq
        %v322 = vshrl.u32 %v321, 7
        %v323 = vsub.s32 %v282, %v322
        %v324 = vrot.slane %v279, %v323
        %v325 = vlaneseq
        %v326 = vshrl.u32 %v325, 7
        %v327 = vsub.s32 %v282, %v326
        %v328 = vrot.slane %v280, %v327
        %vm329 = vcmask 1041409
        %v330 = vsel %vm329, %v304, %v300
        %vm331 = vcmask 1042434
        %v332 = vsel %vm331, %v308, %v330
        %vm333 = vcmask 1043459
        %v334 = vsel %vm333, %v312, %v332
        %vm335 = vcmask 1044484
        %v336 = vsel %vm335, %v316, %v334
        %vm337 = vcmask 1045509
        %v338 = vsel %vm337, %v320, %v336
        %vm339 = vcmask 1046534
        %v340 = vsel %vm339, %v324, %v338
        %vm341 = vcmask 1047559
        %v342 = vsel %vm341, %v328, %v340
        %vm344 = vcmask 64512
        %v345 = vsel %vm344, %v342, -inf
        %346 = vmax.xlane.f32.xlu0 %v345
        %v347 = vpop.xlane.xlu0 %346
        %v349 = vlaneseq
        %v350 = vshrl.u32 %v349, 7
        %v351 = vsub.s32 0, %v350
        %v352 = vrot.slane %v347, %v351
        %v353 = vlaneseq
        %v354 = vshrl.u32 %v353, 7
        %v355 = vsub.s32 1, %v354
        %v356 = vrot.slane %v347, %v355
        %v357 = vlaneseq
        %v358 = vshrl.u32 %v357, 7
        %v359 = vsub.s32 2, %v358
        %v360 = vrot.slane %v347, %v359
        %v361 = vlaneseq
        %v362 = vshrl.u32 %v361, 7
        %v363 = vsub.s32 3, %v362
        %v364 = vrot.slane %v347, %v363
        %v365 = vlaneseq
        %v366 = vshrl.u32 %v365, 7
        %v367 = vsub.s32 4, %v366
        %v368 = vrot.slane %v347, %v367
        %v369 = vlaneseq
        %v370 = vshrl.u32 %v369, 7
        %v371 = vsub.s32 5, %v370
        %v372 = vrot.slane %v347, %v371
        %v373 = vlaneseq
        %v374 = vshrl.u32 %v373, 7
        %v375 = vsub.s32 6, %v374
        %v376 = vrot.slane %v347, %v375
        %v377 = vlaneseq
        %v378 = vshrl.u32 %v377, 7
        %v379 = vsub.s32 7, %v378
        %v380 = vrot.slane %v347, %v379
        %vm389 = vcmp.eq.f32.partialorder %v273, %v352
        %vm390 = vcmp.eq.f32.partialorder %v274, %v356
        %vm391 = vcmp.eq.f32.partialorder %v275, %v360
        %vm392 = vcmp.eq.f32.partialorder %v276, %v364
        %vm393 = vcmp.eq.f32.partialorder %v277, %v368
        %vm394 = vcmp.eq.f32.partialorder %v278, %v372
        %vm395 = vcmp.eq.f32.partialorder %v279, %v376
        %vm396 = vcmp.eq.f32.partialorder %v280, %v380
        %398 = vbcast.lane.b32.xlu0 %v282, 256
        %v399 = vpop.permute.xlu0 %398
        %v400 = vsel %vm389, %v399, 8
        %v401 = vsel %vm390, %v399, 8
        %v402 = vsel %vm391, %v399, 8
        %v403 = vsel %vm392, %v399, 8
        %v404 = vsel %vm393, %v399, 8
        %v405 = vsel %vm394, %v399, 8
        %v406 = vsel %vm395, %v399, 8
        %v407 = vsel %vm396, %v399, 8
        %408 = vset.pattern.permute.xlu0 0
        %409 = vperm.xlu0 %408, %v400
        %v410 = vpop.permute.xlu0 %409
        %411 = vset.pattern.permute.xlu0 0
        %412 = vperm.xlu0 %411, %v401
        %v413 = vpop.permute.xlu0 %412
        %414 = vset.pattern.permute.xlu0 0
        %415 = vperm.xlu0 %414, %v402
        %v416 = vpop.permute.xlu0 %415
        %417 = vset.pattern.permute.xlu0 0
        %418 = vperm.xlu0 %417, %v403
        %v419 = vpop.permute.xlu0 %418
        %420 = vset.pattern.permute.xlu0 0
        %421 = vperm.xlu0 %420, %v404
        %v422 = vpop.permute.xlu0 %421
        %423 = vset.pattern.permute.xlu0 0
        %424 = vperm.xlu0 %423, %v405
        %v425 = vpop.permute.xlu0 %424
        %426 = vset.pattern.permute.xlu0 0
        %427 = vperm.xlu0 %426, %v406
        %v428 = vpop.permute.xlu0 %427
        %429 = vset.pattern.permute.xlu0 0
        %430 = vperm.xlu0 %429, %v407
        %v431 = vpop.permute.xlu0 %430
        %v432 = vlaneseq
        %v433 = vshrl.u32 %v432, 7
        %v434 = vsub.s32 %v282, %v433
        %v435 = vrot.slane %v410, %v434
        %v436 = vlaneseq
        %v437 = vshrl.u32 %v436, 7
        %v438 = vsub.s32 %v282, %v437
        %v439 = vrot.slane %v413, %v438
        %v440 = vlaneseq
        %v441 = vshrl.u32 %v440, 7
        %v442 = vsub.s32 %v282, %v441
        %v443 = vrot.slane %v416, %v442
        %v444 = vlaneseq
        %v445 = vshrl.u32 %v444, 7
        %v446 = vsub.s32 %v282, %v445
        %v447 = vrot.slane %v419, %v446
        %v448 = vlaneseq
        %v449 = vshrl.u32 %v448, 7
        %v450 = vsub.s32 %v282, %v449
        %v451 = vrot.slane %v422, %v450
        %v452 = vlaneseq
        %v453 = vshrl.u32 %v452, 7
        %v454 = vsub.s32 %v282, %v453
        %v455 = vrot.slane %v425, %v454
        %v456 = vlaneseq
        %v457 = vshrl.u32 %v456, 7
        %v458 = vsub.s32 %v282, %v457
        %v459 = vrot.slane %v428, %v458
        %v460 = vlaneseq
        %v461 = vshrl.u32 %v460, 7
        %v462 = vsub.s32 %v282, %v461
        %v463 = vrot.slane %v431, %v462
        %v464 = vsel %vm329, %v439, %v435
        %v465 = vsel %vm331, %v443, %v464
        %v466 = vsel %vm333, %v447, %v465
        %v467 = vsel %vm335, %v451, %v466
        %v468 = vsel %vm337, %v455, %v467
        %v469 = vsel %vm339, %v459, %v468
        %v470 = vsel %vm341, %v463, %v469
        %v471 = vsel %vm344, %v470, 2147483647
        %v472 = vand.u32 %v471, 65535
        %v473 = vshra.s32 %v471, 16
        %v474 = vcvt.s32.f32 %v472
        %v475 = vcvt.s32.f32 %v473
        %476 = vmin.xlane.f32.xlu0 %v475
        %v477 = vpop.xlane.xlu0 %476
        %vm478 = vcmp.eq.f32.partialorder %v475, %v477
        %v479 = vsel %vm478, %v474, inf
        %480 = vmin.xlane.f32.xlu0 %v479
        %v481 = vpop.xlane.xlu0 %480
        %v482 = vcvt.f32.s32 %v481
        %v483 = vcvt.f32.s32 %v477
        %v484 = vshll.u32 %v483, 16
        %v485 = vadd.s32 %v484, %v482
        %vm486 = vcmp.eq.s32.totalorder %v282, %v485
        %v487 = vsel %vm486, %v347, 0.0
        %v488 = vlaneseq
        %v489 = vshrl.u32 %v488, 7
        %v490 = vsub.s32 0, %v489
        %v491 = vrot.slane %v487, %v490
        %493 = vbcast.lane.b32.xlu0 %v491, 256
        %v494 = vpop.permute.xlu0 %493
        %v495 = vlaneseq
        %v496 = vshrl.u32 %v495, 7
        %v497 = vsub.s32 1, %v496
        %v498 = vrot.slane %v487, %v497
        %500 = vbcast.lane.b32.xlu0 %v498, 256
        %v501 = vpop.permute.xlu0 %500
        %v502 = vlaneseq
        %v503 = vshrl.u32 %v502, 7
        %v504 = vsub.s32 2, %v503
        %v505 = vrot.slane %v487, %v504
        %507 = vbcast.lane.b32.xlu0 %v505, 256
        %v508 = vpop.permute.xlu0 %507
        %v509 = vlaneseq
        %v510 = vshrl.u32 %v509, 7
        %v511 = vsub.s32 3, %v510
        %v512 = vrot.slane %v487, %v511
        %514 = vbcast.lane.b32.xlu0 %v512, 256
        %v515 = vpop.permute.xlu0 %514
        %v516 = vlaneseq
        %v517 = vshrl.u32 %v516, 7
        %v518 = vsub.s32 4, %v517
        %v519 = vrot.slane %v487, %v518
        %521 = vbcast.lane.b32.xlu0 %v519, 256
        %v522 = vpop.permute.xlu0 %521
        %v523 = vlaneseq
        %v524 = vshrl.u32 %v523, 7
        %v525 = vsub.s32 5, %v524
        %v526 = vrot.slane %v487, %v525
        %528 = vbcast.lane.b32.xlu0 %v526, 256
        %v529 = vpop.permute.xlu0 %528
        %v530 = vlaneseq
        %v531 = vshrl.u32 %v530, 7
        %v532 = vsub.s32 6, %v531
        %v533 = vrot.slane %v487, %v532
        %535 = vbcast.lane.b32.xlu0 %v533, 256
        %v536 = vpop.permute.xlu0 %535
        %v537 = vlaneseq
        %v538 = vshrl.u32 %v537, 7
        %v539 = vsub.s32 7, %v538
        %v540 = vrot.slane %v487, %v539
        %542 = vbcast.lane.b32.xlu0 %v540, 256
        %v543 = vpop.permute.xlu0 %542
        %v544 = vmul.f32 %v494, %v201
        %v545 = vmul.f32 %v501, %v202
        %v546 = vmul.f32 %v508, %v203
        %v547 = vmul.f32 %v515, %v204
        %v548 = vmul.f32 %v522, %v205
        %v549 = vmul.f32 %v529, %v206
        %v550 = vmul.f32 %v536, %v207
        %v551 = vmul.f32 %v543, %v208
        %v552 = vsel %vm239, %v544, 0.0
        %v553 = vrot.slane %v552, 4
        %v554 = vadd.f32 %v552, %v553
        %v555 = vrot.slane %v554, 2
        %v556 = vadd.f32 %v554, %v555
        %v557 = vrot.slane %v556, 1
        %v558 = vadd.f32 %v556, %v557
        %v559 = vsel %vm239, %v545, 0.0
        %v560 = vrot.slane %v559, 4
        %v561 = vadd.f32 %v559, %v560
        %v562 = vrot.slane %v561, 2
        %v563 = vadd.f32 %v561, %v562
        %v564 = vrot.slane %v563, 1
        %v565 = vadd.f32 %v563, %v564
        %v566 = vsel %vm239, %v546, 0.0
        %v567 = vrot.slane %v566, 4
        %v568 = vadd.f32 %v566, %v567
        %v569 = vrot.slane %v568, 2
        %v570 = vadd.f32 %v568, %v569
        %v571 = vrot.slane %v570, 1
        %v572 = vadd.f32 %v570, %v571
        %v573 = vsel %vm239, %v547, 0.0
        %v574 = vrot.slane %v573, 4
        %v575 = vadd.f32 %v573, %v574
        %v576 = vrot.slane %v575, 2
        %v577 = vadd.f32 %v575, %v576
        %v578 = vrot.slane %v577, 1
        %v579 = vadd.f32 %v577, %v578
        %v580 = vsel %vm239, %v548, 0.0
        %v581 = vrot.slane %v580, 4
        %v582 = vadd.f32 %v580, %v581
        %v583 = vrot.slane %v582, 2
        %v584 = vadd.f32 %v582, %v583
        %v585 = vrot.slane %v584, 1
        %v586 = vadd.f32 %v584, %v585
        %v587 = vsel %vm239, %v549, 0.0
        %v588 = vrot.slane %v587, 4
        %v589 = vadd.f32 %v587, %v588
        %v590 = vrot.slane %v589, 2
        %v591 = vadd.f32 %v589, %v590
        %v592 = vrot.slane %v591, 1
        %v593 = vadd.f32 %v591, %v592
        %v594 = vsel %vm239, %v550, 0.0
        %v595 = vrot.slane %v594, 4
        %v596 = vadd.f32 %v594, %v595
        %v597 = vrot.slane %v596, 2
        %v598 = vadd.f32 %v596, %v597
        %v599 = vrot.slane %v598, 1
        %v600 = vadd.f32 %v598, %v599
        %v601 = vsel %vm239, %v551, 0.0
        %v602 = vrot.slane %v601, 4
        %v603 = vadd.f32 %v601, %v602
        %v604 = vrot.slane %v603, 2
        %v605 = vadd.f32 %v603, %v604
        %v606 = vrot.slane %v605, 1
        %v607 = vadd.f32 %v605, %v606
        %vm608 = vcmp.eq.s32.totalorder %v282, 0
        %v609 = vadd.s32 %v485, %v288
        %v610 = vsel %vm608, %v609, 0
        %v611 = vsel %vm486, -3.4028235e+38, %v342
        %v612 = vsel %vm344, %v611, -inf
        %613 = vmax.xlane.f32.xlu0 %v612
        %v614 = vpop.xlane.xlu0 %613
        %vm615 = vcmp.eq.f32.partialorder %v611, %v614
        %v616 = vsel %vm615, %v282, 8
        %v617 = vsel %vm344, %v616, 2147483647
        %v618 = vand.u32 %v617, 65535
        %v619 = vshra.s32 %v617, 16
        %v620 = vcvt.s32.f32 %v618
        %v621 = vcvt.s32.f32 %v619
        %622 = vmin.xlane.f32.xlu0 %v621
        %v623 = vpop.xlane.xlu0 %622
        %vm624 = vcmp.eq.f32.partialorder %v621, %v623
        %v625 = vsel %vm624, %v620, inf
        %626 = vmin.xlane.f32.xlu0 %v625
        %v627 = vpop.xlane.xlu0 %626
        %v628 = vcvt.f32.s32 %v627
        %v629 = vcvt.f32.s32 %v623
        %v630 = vshll.u32 %v629, 16
        %v631 = vadd.s32 %v630, %v628
        %vm632 = vcmp.eq.s32.totalorder %v282, %v631
        %v633 = vsel %vm632, %v614, 0.0
        %v634 = vlaneseq
        %v635 = vshrl.u32 %v634, 7
        %v636 = vsub.s32 0, %v635
        %v637 = vrot.slane %v633, %v636
        %639 = vbcast.lane.b32.xlu0 %v637, 256
        %v640 = vpop.permute.xlu0 %639
        %v641 = vlaneseq
        %v642 = vshrl.u32 %v641, 7
        %v643 = vsub.s32 1, %v642
        %v644 = vrot.slane %v633, %v643
        %646 = vbcast.lane.b32.xlu0 %v644, 256
        %v647 = vpop.permute.xlu0 %646
        %v648 = vlaneseq
        %v649 = vshrl.u32 %v648, 7
        %v650 = vsub.s32 2, %v649
        %v651 = vrot.slane %v633, %v650
        %653 = vbcast.lane.b32.xlu0 %v651, 256
        %v654 = vpop.permute.xlu0 %653
        %v655 = vlaneseq
        %v656 = vshrl.u32 %v655, 7
        %v657 = vsub.s32 3, %v656
        %v658 = vrot.slane %v633, %v657
        %660 = vbcast.lane.b32.xlu0 %v658, 256
        %v661 = vpop.permute.xlu0 %660
        %v662 = vlaneseq
        %v663 = vshrl.u32 %v662, 7
        %v664 = vsub.s32 4, %v663
        %v665 = vrot.slane %v633, %v664
        %667 = vbcast.lane.b32.xlu0 %v665, 256
        %v668 = vpop.permute.xlu0 %667
        %v669 = vlaneseq
        %v670 = vshrl.u32 %v669, 7
        %v671 = vsub.s32 5, %v670
        %v672 = vrot.slane %v633, %v671
        %674 = vbcast.lane.b32.xlu0 %v672, 256
        %v675 = vpop.permute.xlu0 %674
        %v676 = vlaneseq
        %v677 = vshrl.u32 %v676, 7
        %v678 = vsub.s32 6, %v677
        %v679 = vrot.slane %v633, %v678
        %681 = vbcast.lane.b32.xlu0 %v679, 256
        %v682 = vpop.permute.xlu0 %681
        %v683 = vlaneseq
        %v684 = vshrl.u32 %v683, 7
        %v685 = vsub.s32 7, %v684
        %v686 = vrot.slane %v633, %v685
        %688 = vbcast.lane.b32.xlu0 %v686, 256
        %v689 = vpop.permute.xlu0 %688
        %v690 = vmul.f32 %v640, %v201
        %v691 = vmul.f32 %v647, %v202
        %v692 = vmul.f32 %v654, %v203
        %v693 = vmul.f32 %v661, %v204
        %v694 = vmul.f32 %v668, %v205
        %v695 = vmul.f32 %v675, %v206
        %v696 = vmul.f32 %v682, %v207
        %v697 = vmul.f32 %v689, %v208
        %v698 = vsel %vm239, %v690, 0.0
        %v699 = vrot.slane %v698, 4
        %v700 = vadd.f32 %v698, %v699
        %v701 = vrot.slane %v700, 2
        %v702 = vadd.f32 %v700, %v701
        %v703 = vrot.slane %v702, 1
        %v704 = vadd.f32 %v702, %v703
        %v705 = vsel %vm239, %v691, 0.0
        %v706 = vrot.slane %v705, 4
        %v707 = vadd.f32 %v705, %v706
        %v708 = vrot.slane %v707, 2
        %v709 = vadd.f32 %v707, %v708
        %v710 = vrot.slane %v709, 1
        %v711 = vadd.f32 %v709, %v710
        %v712 = vsel %vm239, %v692, 0.0
        %v713 = vrot.slane %v712, 4
        %v714 = vadd.f32 %v712, %v713
        %v715 = vrot.slane %v714, 2
        %v716 = vadd.f32 %v714, %v715
        %v717 = vrot.slane %v716, 1
        %v718 = vadd.f32 %v716, %v717
        %v719 = vsel %vm239, %v693, 0.0
        %v720 = vrot.slane %v719, 4
        %v721 = vadd.f32 %v719, %v720
        %v722 = vrot.slane %v721, 2
        %v723 = vadd.f32 %v721, %v722
        %v724 = vrot.slane %v723, 1
        %v725 = vadd.f32 %v723, %v724
        %v726 = vsel %vm239, %v694, 0.0
        %v727 = vrot.slane %v726, 4
        %v728 = vadd.f32 %v726, %v727
        %v729 = vrot.slane %v728, 2
        %v730 = vadd.f32 %v728, %v729
        %v731 = vrot.slane %v730, 1
        %v732 = vadd.f32 %v730, %v731
        %v733 = vsel %vm239, %v695, 0.0
        %v734 = vrot.slane %v733, 4
        %v735 = vadd.f32 %v733, %v734
        %v736 = vrot.slane %v735, 2
        %v737 = vadd.f32 %v735, %v736
        %v738 = vrot.slane %v737, 1
        %v739 = vadd.f32 %v737, %v738
        %v740 = vsel %vm239, %v696, 0.0
        %v741 = vrot.slane %v740, 4
        %v742 = vadd.f32 %v740, %v741
        %v743 = vrot.slane %v742, 2
        %v744 = vadd.f32 %v742, %v743
        %v745 = vrot.slane %v744, 1
        %v746 = vadd.f32 %v744, %v745
        %v747 = vsel %vm239, %v697, 0.0
        %v748 = vrot.slane %v747, 4
        %v749 = vadd.f32 %v747, %v748
        %v750 = vrot.slane %v749, 2
        %v751 = vadd.f32 %v749, %v750
        %v752 = vrot.slane %v751, 1
        %v753 = vadd.f32 %v751, %v752
        %vm754 = vcmp.eq.s32.totalorder %v282, 1
        %v755 = vadd.s32 %v631, %v288
        %v756 = vsel %vm754, %v755, %v610
        %v757 = vsel %vm632, -3.4028235e+38, %v611
        %v758 = vsel %vm344, %v757, -inf
        %759 = vmax.xlane.f32.xlu0 %v758
        %v760 = vpop.xlane.xlu0 %759
        %vm761 = vcmp.eq.f32.partialorder %v757, %v760
        %v762 = vsel %vm761, %v282, 8
        %v763 = vsel %vm344, %v762, 2147483647
        %v764 = vand.u32 %v763, 65535
        %v765 = vshra.s32 %v763, 16
        %v766 = vcvt.s32.f32 %v764
        %v767 = vcvt.s32.f32 %v765
        %768 = vmin.xlane.f32.xlu0 %v767
        %v769 = vpop.xlane.xlu0 %768
        %vm770 = vcmp.eq.f32.partialorder %v767, %v769
        %v771 = vsel %vm770, %v766, inf
        %772 = vmin.xlane.f32.xlu0 %v771
        %v773 = vpop.xlane.xlu0 %772
        %v774 = vcvt.f32.s32 %v773
        %v775 = vcvt.f32.s32 %v769
        %v776 = vshll.u32 %v775, 16
        %v777 = vadd.s32 %v776, %v774
        %vm778 = vcmp.eq.s32.totalorder %v282, %v777
        %v779 = vsel %vm778, %v760, 0.0
        %v780 = vlaneseq
        %v781 = vshrl.u32 %v780, 7
        %v782 = vsub.s32 0, %v781
        %v783 = vrot.slane %v779, %v782
        %785 = vbcast.lane.b32.xlu0 %v783, 256
        %v786 = vpop.permute.xlu0 %785
        %v787 = vlaneseq
        %v788 = vshrl.u32 %v787, 7
        %v789 = vsub.s32 1, %v788
        %v790 = vrot.slane %v779, %v789
        %792 = vbcast.lane.b32.xlu0 %v790, 256
        %v793 = vpop.permute.xlu0 %792
        %v794 = vlaneseq
        %v795 = vshrl.u32 %v794, 7
        %v796 = vsub.s32 2, %v795
        %v797 = vrot.slane %v779, %v796
        %799 = vbcast.lane.b32.xlu0 %v797, 256
        %v800 = vpop.permute.xlu0 %799
        %v801 = vlaneseq
        %v802 = vshrl.u32 %v801, 7
        %v803 = vsub.s32 3, %v802
        %v804 = vrot.slane %v779, %v803
        %806 = vbcast.lane.b32.xlu0 %v804, 256
        %v807 = vpop.permute.xlu0 %806
        %v808 = vlaneseq
        %v809 = vshrl.u32 %v808, 7
        %v810 = vsub.s32 4, %v809
        %v811 = vrot.slane %v779, %v810
        %813 = vbcast.lane.b32.xlu0 %v811, 256
        %v814 = vpop.permute.xlu0 %813
        %v815 = vlaneseq
        %v816 = vshrl.u32 %v815, 7
        %v817 = vsub.s32 5, %v816
        %v818 = vrot.slane %v779, %v817
        %820 = vbcast.lane.b32.xlu0 %v818, 256
        %v821 = vpop.permute.xlu0 %820
        %v822 = vlaneseq
        %v823 = vshrl.u32 %v822, 7
        %v824 = vsub.s32 6, %v823
        %v825 = vrot.slane %v779, %v824
        %827 = vbcast.lane.b32.xlu0 %v825, 256
        %v828 = vpop.permute.xlu0 %827
        %v829 = vlaneseq
        %v830 = vshrl.u32 %v829, 7
        %v831 = vsub.s32 7, %v830
        %v832 = vrot.slane %v779, %v831
        %834 = vbcast.lane.b32.xlu0 %v832, 256
        %v835 = vpop.permute.xlu0 %834
        %v836 = vmul.f32 %v786, %v201
        %v837 = vmul.f32 %v793, %v202
        %v838 = vmul.f32 %v800, %v203
        %v839 = vmul.f32 %v807, %v204
        %v840 = vmul.f32 %v814, %v205
        %v841 = vmul.f32 %v821, %v206
        %v842 = vmul.f32 %v828, %v207
        %v843 = vmul.f32 %v835, %v208
        %v844 = vsel %vm239, %v836, 0.0
        %v845 = vrot.slane %v844, 4
        %v846 = vadd.f32 %v844, %v845
        %v847 = vrot.slane %v846, 2
        %v848 = vadd.f32 %v846, %v847
        %v849 = vrot.slane %v848, 1
        %v850 = vadd.f32 %v848, %v849
        %v851 = vsel %vm239, %v837, 0.0
        %v852 = vrot.slane %v851, 4
        %v853 = vadd.f32 %v851, %v852
        %v854 = vrot.slane %v853, 2
        %v855 = vadd.f32 %v853, %v854
        %v856 = vrot.slane %v855, 1
        %v857 = vadd.f32 %v855, %v856
        %v858 = vsel %vm239, %v838, 0.0
        %v859 = vrot.slane %v858, 4
        %v860 = vadd.f32 %v858, %v859
        %v861 = vrot.slane %v860, 2
        %v862 = vadd.f32 %v860, %v861
        %v863 = vrot.slane %v862, 1
        %v864 = vadd.f32 %v862, %v863
        %v865 = vsel %vm239, %v839, 0.0
        %v866 = vrot.slane %v865, 4
        %v867 = vadd.f32 %v865, %v866
        %v868 = vrot.slane %v867, 2
        %v869 = vadd.f32 %v867, %v868
        %v870 = vrot.slane %v869, 1
        %v871 = vadd.f32 %v869, %v870
        %v872 = vsel %vm239, %v840, 0.0
        %v873 = vrot.slane %v872, 4
        %v874 = vadd.f32 %v872, %v873
        %v875 = vrot.slane %v874, 2
        %v876 = vadd.f32 %v874, %v875
        %v877 = vrot.slane %v876, 1
        %v878 = vadd.f32 %v876, %v877
        %v879 = vsel %vm239, %v841, 0.0
        %v880 = vrot.slane %v879, 4
        %v881 = vadd.f32 %v879, %v880
        %v882 = vrot.slane %v881, 2
        %v883 = vadd.f32 %v881, %v882
        %v884 = vrot.slane %v883, 1
        %v885 = vadd.f32 %v883, %v884
        %v886 = vsel %vm239, %v842, 0.0
        %v887 = vrot.slane %v886, 4
        %v888 = vadd.f32 %v886, %v887
        %v889 = vrot.slane %v888, 2
        %v890 = vadd.f32 %v888, %v889
        %v891 = vrot.slane %v890, 1
        %v892 = vadd.f32 %v890, %v891
        %v893 = vsel %vm239, %v843, 0.0
        %v894 = vrot.slane %v893, 4
        %v895 = vadd.f32 %v893, %v894
        %v896 = vrot.slane %v895, 2
        %v897 = vadd.f32 %v895, %v896
        %v898 = vrot.slane %v897, 1
        %v899 = vadd.f32 %v897, %v898
        %vm900 = vcmp.eq.s32.totalorder %v282, 2
        %v901 = vadd.s32 %v777, %v288
        %v902 = vsel %vm900, %v901, %v756
        %v927 = vrot.slane %v565, 7
        %v928 = vsel %vm329, %v927, %v558
        %v929 = vrot.slane %v572, 6
        %v930 = vsel %vm331, %v929, %v928
        %v931 = vrot.slane %v579, 5
        %v932 = vsel %vm333, %v931, %v930
        %v933 = vrot.slane %v586, 4
        %v934 = vsel %vm335, %v933, %v932
        %v935 = vrot.slane %v593, 3
        %v936 = vsel %vm337, %v935, %v934
        %v937 = vrot.slane %v600, 2
        %v938 = vsel %vm339, %v937, %v936
        %v939 = vrot.slane %v607, 1
        %v940 = vsel %vm341, %v939, %v938
        %v941 = vrot.slane %v711, 7
        %v942 = vsel %vm329, %v941, %v704
        %v943 = vrot.slane %v718, 6
        %v944 = vsel %vm331, %v943, %v942
        %v945 = vrot.slane %v725, 5
        %v946 = vsel %vm333, %v945, %v944
        %v947 = vrot.slane %v732, 4
        %v948 = vsel %vm335, %v947, %v946
        %v949 = vrot.slane %v739, 3
        %v950 = vsel %vm337, %v949, %v948
        %v951 = vrot.slane %v746, 2
        %v952 = vsel %vm339, %v951, %v950
        %v953 = vrot.slane %v753, 1
        %v954 = vsel %vm341, %v953, %v952
        %v955 = vrot.slane %v857, 7
        %v956 = vsel %vm329, %v955, %v850
        %v957 = vrot.slane %v864, 6
        %v958 = vsel %vm331, %v957, %v956
        %v959 = vrot.slane %v871, 5
        %v960 = vsel %vm333, %v959, %v958
        %v961 = vrot.slane %v878, 4
        %v962 = vsel %vm335, %v961, %v960
        %v963 = vrot.slane %v885, 3
        %v964 = vsel %vm337, %v963, %v962
        %v965 = vrot.slane %v892, 2
        %v966 = vsel %vm339, %v965, %v964
        %v967 = vrot.slane %v899, 1
        %v968 = vsel %vm341, %v967, %v966
        %972 = vst.msk [vmem:[%s192] sm:$0xff] %vm239, %v940
        %973 = vst.msk [vmem:[%s192 + $0x8] sm:$0xff] %vm239, %v954
        %974 = vst.msk [vmem:[%s192 + $0x10] sm:$0xff] %vm239, %v968
        %975 = vst [vmem:[%s199] sm:$0xff] %v902
        %s976 = sand.u32 %s79, 1
        %s977 = scalar_lea.sflag [#allocation4], %s976
        %s978 = sand.u32 %s79, 1
        %s979 = smul.addr %s978, 24
        %s980 = scalar_lea.vmem [#allocation5], %s979
        %s981 = sand.u32 %s105, 1
        %s982 = scalar_lea.sflag [#allocation7], %s981
        %s983 = sand.u32 %s105, 1
        %s984 = smul.addr %s983, 8
        %s985 = scalar_lea.vmem [#allocation6], %s984
        // Predicated region
        $region33: #{tpu_custom_call.1} parent=27 // pred_check
          %p986 = pneg %p89
        $region34: #{tpu_custom_call.1} parent=27 // pred_check_branch
          %988 = sbr.rel (%p986) target = $region36
        $region35: #{tpu_custom_call.1} parent=27 // pred_region
          %s990 = ssub.s32 384, 384
          %991 = vsyncadd %s977, %s990
          %s992 = smul.addr %s24, 128
          %s993 = scalar_lea.hbm %s2, %s992
          %s994 = sshll.u32 %s980, 4
          %s995 = int_to_ptr.vmem [resolvable:$true] %s994
          %1000 = dma.vmem_to_hbm [thread:$0]  %s995, 384, %s993, %s977, 128, 512, 8
        $region36: #{tpu_custom_call.1} parent=27 // pred_fallthru
          _
        // Predicated region
        $region37: #{tpu_custom_call.1} parent=27 // pred_check
          %p1001 = pneg %p115
        $region38: #{tpu_custom_call.1} parent=27 // pred_check_branch
          %1003 = sbr.rel (%p1001) target = $region40
        $region39: #{tpu_custom_call.1} parent=27 // pred_region
          %s1005 = ssub.s32 128, 128
          %1006 = vsyncadd %s982, %s1005
          %s1007 = smul.addr %s24, 128
          %s1008 = scalar_lea.hbm %s3, %s1007
          %s1010 = sshll.u32 %s985, 4
          %s1011 = int_to_ptr.vmem [resolvable:$true] %s1010
          %1013 = dma.vmem_to_hbm [thread:$0]  %s1011, 128, %s1008, %s982
        $region40: #{tpu_custom_call.1} parent=27 // pred_fallthru
          _
      $region28: #{tpu_custom_call.1} parent=5 // pred_fallthru
        _
      %p1014 = scmp.le.s32.totalorder 2, %s19
      // Predicated region
      $region41: #{tpu_custom_call.1} parent=5 // pred_check
        %p1015 = pneg %p1014
      $region42: #{tpu_custom_call.1} parent=5 // pred_check_branch
        %1017 = sbr.rel (%p1015) target = $region44
      $region43: #{tpu_custom_call.1} parent=5 // pred_region
        %s1018 = ssub.s32 %s19, 2
        // Predicated region
        $region45: #{tpu_custom_call.1} parent=43 // pred_check
          %p1019 = pneg %p95
        $region46: #{tpu_custom_call.1} parent=43 // pred_check_branch
          %1021 = sbr.rel (%p1019) target = $region48
        $region47: #{tpu_custom_call.1} parent=43 // pred_region
          %s1022 = sand.u32 %s80, 1
          %s1023 = scalar_lea.sflag [#allocation4], %s1022
          %s1024 = sand.u32 %s80, 1
          %s1025 = smul.addr %s1024, 24
          %s1026 = scalar_lea.vmem [#allocation5], %s1025
          %1027 = dma.done %s1023, 384
        $region48: #{tpu_custom_call.1} parent=43 // pred_fallthru
          _
        // Predicated region
        $region49: #{tpu_custom_call.1} parent=43 // pred_check
          %p1028 = pneg %p121
        $region50: #{tpu_custom_call.1} parent=43 // pred_check_branch
          %1030 = sbr.rel (%p1028) target = $region52
        $region51: #{tpu_custom_call.1} parent=43 // pred_region
          %s1031 = sand.u32 %s106, 1
          %s1032 = scalar_lea.sflag [#allocation7], %s1031
          %s1033 = sand.u32 %s106, 1
          %s1034 = smul.addr %s1033, 8
          %s1035 = scalar_lea.vmem [#allocation6], %s1034
          %1036 = dma.done %s1032, 128
        $region52: #{tpu_custom_call.1} parent=43 // pred_fallthru
          _
      $region44: #{tpu_custom_call.1} parent=5 // pred_fallthru
        _
    $region6: #{tpu_custom_call.1} parent=1 // loop_footer
      %s23 = sadd.s32 1, %s19
    $region7: #{tpu_custom_call.1} parent=1 // loop_footer_branch
      %18 = sbr.rel target = $region3
    $region8: #{tpu_custom_call.1} parent=1 // loop_exit
      _
    %1037 = vsyncpa [#allocation3], 1
    %s1038 = scalar_lea.sflag [#allocation3], 1
    %1039 = vsyncpa %s1038, 1
    %1040 = vsyncpa [#allocation4], 1
    %s1041 = scalar_lea.sflag [#allocation4], 1
    %1042 = vsyncpa %s1041, 1
    %1043 = vsyncpa [#allocation7], 1
    %s1044 = scalar_lea.sflag [#allocation7], 1
    %1045 = vsyncpa %s1044, 1

</llo_original>
